<compile_context>
chip_gen: v5e
topology: v5e:2x2
jax: 0.10.0
libtpu: 0.0.40
codegen_flags: <defaults>
</compile_context>

<pallas_src>
import jax
import jax.numpy as jnp
from jax.experimental import pallas as pl
from jax.experimental.pallas import tpu as pltpu

LANE = 128


def _round_up(x, m):
    return ((x + m - 1) // m) * m


def _device_kind():
    try:
        return jax.devices()[0].device_kind.lower()
    except Exception:
        return ""


def _vmem_capacity_bytes():
    try:
        return int(pltpu.get_tpu_info().vmem_capacity_bytes)
    except Exception:
        kind = _device_kind()
        if ("v7" in kind) or ("7x" in kind):
            return 64 << 20          # v7x: 64 MiB per TensorCore
        return 128 << 20             # v5e / v6e


def _pick_batch_tile(B, kind):
    """Primary tuning knob; override via actor_forward(batch_tile=...)."""
    is_v5 = "v5" in kind
    is_v7 = ("v7" in kind) or ("7x" in kind)
    # v5e MXU is 4x128^2 (M=128 fills rows, go bigger only for large B);
    # v6e/v7x MXU is 2x256^2 -> M=256 and per-grid-step overhead argues big.
    tile = (256 if B >= 1024 else 128) if is_v5 else 256
    if B >= 2 * tile:
        return tile
    if is_v7 and B > 16:
        # Keep >= 2 grid steps so both v7x TensorCores get work; 16-row
        # granularity keeps bf16 sublane packing clean.
        return min(tile, max(16, _round_up(pl.cdiv(B, 2), 16)))
    # Single (possibly partial) tile: no larger than the 8-aligned batch.
    return min(tile, max(8, _round_up(B, 8)))


def actor_kernel(x_ref, w1_ref, b1_ref, w2_ref, b2_ref, w3_ref, b3_ref, o_ref):
    # Whole hot path (3 matmuls + activations) runs in VMEM on one batch tile.
    # MXU operands are bf16 (weight dtype), accumulation is f32.
    # Inter-layer epilogue (bias + ReLU) runs in b1_ref.dtype:
    #   bf16 on v6e/v7x (bf16 VPU), f32 on v5e.  Final bias + tanh is f32.
    cdt = w1_ref.dtype                               # MXU operand dtype (bf16)
    edt = b1_ref.dtype                               # epilogue dtype
    x = x_ref[...].astype(cdt)                       # in-kernel cast (VPU, free under MXU/DMA slack)
    a1 = jnp.dot(x, w1_ref[...], preferred_element_type=jnp.float32)
    h1 = jnp.maximum(a1.astype(edt) + b1_ref[...], 0).astype(cdt)
    a2 = jnp.dot(h1, w2_ref[...], preferred_element_type=jnp.float32)
    h2 = jnp.maximum(a2.astype(edt) + b2_ref[...], 0).astype(cdt)
    y = jnp.dot(h2, w3_ref[...], preferred_element_type=jnp.float32) + b3_ref[...]
    o_ref[...] = jnp.tanh(y).astype(o_ref.dtype)


def prepare_actor_params(params, compute_dtype=jnp.bfloat16, epilogue_dtype=None):
    """One-time layout prep (call once, outside the forward hot path).

    PyTorch nn.Linear weights are [out, in]; transpose to [in, out], cast
    matmul operands to `compute_dtype`, pick the epilogue dtype per TPU
    generation, and pad the output feature axis of W3/b3 to a multiple of 128
    so kernel output stores are lane-dense (unmasked vst).
    """
    if epilogue_dtype is None:
        # bf16 bias/ReLU epilogue on v6e/v7x (bf16 VPU); f32 on v5e.
        epilogue_dtype = jnp.float32 if "v5" in _device_kind() else compute_dtype

    input_dim = params["w1"].shape[1]
    hidden_dim = params["w1"].shape[0]
    output_dim = params["w3"].shape[0]
    out_pad = _round_up(output_dim, LANE)

    w1 = params["w1"].T.astype(compute_dtype)                      # [in, H]
    w2 = params["w2"].T.astype(compute_dtype)                      # [H, H]
    w3 = jnp.pad(params["w3"].T.astype(compute_dtype),
                 ((0, 0), (0, out_pad - output_dim)))              # [H, out_pad]

    b1 = params["b1"].reshape(1, -1).astype(epilogue_dtype)        # [1, H]
    b2 = params["b2"].reshape(1, -1).astype(epilogue_dtype)        # [1, H]
    b3 = jnp.pad(params["b3"].reshape(1, -1).astype(jnp.float32),
                 ((0, 0), (0, out_pad - output_dim)))              # [1, out_pad] (f32)

    return {
        "w1": w1, "b1": b1, "w2": w2, "b2": b2, "w3": w3, "b3": b3,
        "input_dim": input_dim, "hidden_dim": hidden_dim,
        "output_dim": output_dim, "out_pad": out_pad,
        "compute_dtype": jnp.dtype(compute_dtype),
        "epilogue_dtype": jnp.dtype(epilogue_dtype),
    }


def actor_forward(x, prepared, *, batch_tile=None, out_dtype=jnp.float32):
    """x: [B, input_dim] float32.  prepared: output of prepare_actor_params.

    batch_tile=None -> auto per TPU generation.  Arbitrary B supported via a
    ragged (masked) tail tile — no explicit batch padding of x.
    out_dtype=jnp.bfloat16 halves the dominant output-store DMA if the caller
    tolerates bf16 actions (tanh output is in [-1, 1]).
    """
    B, input_dim = x.shape
    assert input_dim == prepared["input_dim"]
    hidden_dim = prepared["hidden_dim"]
    output_dim = prepared["output_dim"]
    out_pad = prepared["out_pad"]
    cdt = prepared["compute_dtype"]
    edt = prepared["epilogue_dtype"]
    kind = _device_kind()

    if batch_tile is None:
        batch_tile = _pick_batch_tile(B, kind)
    n_tiles = pl.cdiv(B, batch_tile)

    # VMEM budget: BlockSpec buffers are double-buffered; intermediates live
    # once.  Clamp to ~0.8 x physical VMEM so the request is valid on v7x.
    w_isz = jnp.dtype(cdt).itemsize
    e_isz = jnp.dtype(edt).itemsize
    o_isz = jnp.dtype(out_dtype).itemsize
    weight_bytes = (input_dim * hidden_dim + hidden_dim * hidden_dim
                    + hidden_dim * out_pad) * w_isz
    bias_bytes = 2 * hidden_dim * e_isz + out_pad * 4
    block_bytes = (batch_tile * input_dim * 4                 # x tile (f32)
                   + weight_bytes + bias_bytes
                   + batch_tile * out_pad * o_isz)            # out tile
    act_bytes = batch_tile * (2 * hidden_dim * (4 + e_isz) + out_pad * 4)
    vmem_cap = _vmem_capacity_bytes()
    vmem_limit = int(min(max(2 * block_bytes + act_bytes + (8 << 20), 32 << 20),
                         int(0.8 * vmem_cap)))

    flops = 2 * B * (input_dim * hidden_dim + hidden_dim * hidden_dim
                     + hidden_dim * out_pad)
    bytes_accessed = (B * input_dim * 4 + weight_bytes + bias_bytes
                      + B * out_pad * o_isz)

    resident = lambda i: (0, 0)   # weights/biases: same block every grid step

    out_padded = pl.pallas_call(
        actor_kernel,
        out_shape=jax.ShapeDtypeStruct((B, out_pad), out_dtype),
        grid_spec=pltpu.PrefetchScalarGridSpec(
            num_scalar_prefetch=0,
            grid=(n_tiles,),
            in_specs=[
                pl.BlockSpec((batch_tile, input_dim), lambda i: (i, 0)),  # x (f32)
                pl.BlockSpec((input_dim, hidden_dim), resident),          # W1
                pl.BlockSpec((1, hidden_dim), resident),                  # b1
                pl.BlockSpec((hidden_dim, hidden_dim), resident),         # W2
                pl.BlockSpec((1, hidden_dim), resident),                  # b2
                pl.BlockSpec((hidden_dim, out_pad), resident),            # W3
                pl.BlockSpec((1, out_pad), resident),                     # b3
            ],
            out_specs=pl.BlockSpec((batch_tile, out_pad), lambda i: (i, 0)),
        ),
        compiler_params=pltpu.CompilerParams(
            dimension_semantics=("parallel",),
            vmem_limit_bytes=vmem_limit,
        ),
        cost_estimate=pl.CostEstimate(
            flops=flops,
            transcendentals=B * out_pad,
            bytes_accessed=bytes_accessed,
        ),
    )(x, prepared["w1"], prepared["b1"], prepared["w2"], prepared["b2"],
      prepared["w3"], prepared["b3"])

    return out_padded[:, :output_dim]


def init_actor_params(key, input_dim, output_dim, hidden_dim=256):
    """Deterministic synthetic init, PyTorch weight convention [out, in]."""
    ks = jax.random.split(key, 6)
    scale = 0.1
    return {
        "w1": scale * jax.random.normal(ks[0], (hidden_dim, input_dim), jnp.float32),
        "b1": scale * jax.random.normal(ks[1], (hidden_dim,), jnp.float32),
        "w2": scale * jax.random.normal(ks[2], (hidden_dim, hidden_dim), jnp.float32),
        "b2": scale * jax.random.normal(ks[3], (hidden_dim,), jnp.float32),
        "w3": scale * jax.random.normal(ks[4], (output_dim, hidden_dim), jnp.float32),
        "b3": scale * jax.random.normal(ks[5], (output_dim,), jnp.float32),
    }


def actor_reference(x, params, compute_dtype=jnp.float32, epilogue_dtype=jnp.float32):
    """Pure-JAX reference mirroring the kernel's precision choices."""
    def qc(a):
        return a.astype(compute_dtype).astype(jnp.float32)

    def qe(a):
        return a.astype(epilogue_dtype).astype(jnp.float32)

    a1 = qc(x) @ qc(params["w1"].T)
    h1 = qe(jnp.maximum(qe(a1) + qe(params["b1"]), 0.0))
    a2 = qc(h1) @ qc(params["w2"].T)
    h2 = qe(jnp.maximum(qe(a2) + qe(params["b2"]), 0.0))
    return jnp.tanh(qc(h2) @ qc(params["w3"].T) + params["b3"])


if __name__ == "__main__":
    key = jax.random.PRNGKey(0)
    k_x, k_p = jax.random.split(key)

    # FetchPush-style Actor(input_dim, output_dim); hidden_dim=256 is the
    # module default.  batch=37 deliberately exercises the ragged-tail
    # (masked) batch tile and the auto batch_tile heuristic.
    batch, input_dim, output_dim, hidden_dim = 37, 16, 4, 256

    x = jax.random.normal(k_x, (batch, input_dim), jnp.float32)
    params = init_actor_params(k_p, input_dim, output_dim, hidden_dim)

    prepared = prepare_actor_params(params, compute_dtype=jnp.bfloat16)
    out = jax.block_until_ready(actor_forward(x, prepared))

    assert out.shape == (batch, output_dim)
    assert bool(jnp.all(jnp.isfinite(out)))

    # Reference matching the kernel arithmetic (bf16 MXU operands, f32
    # accumulate, epilogue dtype as prepared) plus a loose full-f32 check.
    ref_matched = actor_reference(x, params, compute_dtype=jnp.bfloat16,
                                  epilogue_dtype=prepared["epilogue_dtype"])
    ref_f32 = actor_reference(x, params)

    assert jnp.allclose(out, ref_matched, atol=2e-3, rtol=2e-3), \
        "mismatch vs matched-precision reference"
    assert jnp.allclose(out, ref_f32, atol=5e-2, rtol=5e-2), \
        "mismatch vs f32 reference"

    print("KERNEL_OK")
</pallas_src>

<mosaic_0001>
module attributes {stable_mosaic.version = 11 : i64} {
  func.func @actor_kernel(%arg0: i32, %arg1: memref<40x16xf32, #tpu.memory_space<vmem>>, %arg2: memref<16x256xbf16, #tpu.memory_space<vmem>>, %arg3: memref<1x256xbf16, #tpu.memory_space<vmem>>, %arg4: memref<256x256xbf16, #tpu.memory_space<vmem>>, %arg5: memref<1x256xbf16, #tpu.memory_space<vmem>>, %arg6: memref<256x128xbf16, #tpu.memory_space<vmem>>, %arg7: memref<1x128xf32, #tpu.memory_space<vmem>>, %arg8: memref<40x128xf32, #tpu.memory_space<vmem>>) attributes {dimension_semantics = [#tpu.dimension_semantics<parallel>], iteration_bounds = array<i64: 1>, scalar_prefetch = 0 : i64, scratch_operands = 0 : i64, tpu.core_type = #tpu.core_type<tc>, window_params = [{transform_indices = @transform_0, window_bounds = array<i64: 40, 16>}, {pipeline_mode = #tpu.pipeline_mode<synchronous>, transform_indices = @transform_1, window_bounds = array<i64: 16, 256>}, {pipeline_mode = #tpu.pipeline_mode<synchronous>, transform_indices = @transform_2, window_bounds = array<i64: 1, 256>}, {pipeline_mode = #tpu.pipeline_mode<synchronous>, transform_indices = @transform_3, window_bounds = array<i64: 256, 256>}, {pipeline_mode = #tpu.pipeline_mode<synchronous>, transform_indices = @transform_4, window_bounds = array<i64: 1, 256>}, {pipeline_mode = #tpu.pipeline_mode<synchronous>, transform_indices = @transform_5, window_bounds = array<i64: 256, 128>}, {pipeline_mode = #tpu.pipeline_mode<synchronous>, transform_indices = @transform_6, window_bounds = array<i64: 1, 128>}, {transform_indices = @transform_7, window_bounds = array<i64: 40, 128>}]} {
    %c0 = arith.constant 0 : index
    %c0_0 = arith.constant 0 : index
    %0 = vector.load %arg1[%c0, %c0_0] : memref<40x16xf32, #tpu.memory_space<vmem>>, vector<40x16xf32>
    %1 = arith.truncf %0 : vector<40x16xf32> to vector<40x16xbf16>
    %c0_1 = arith.constant 0 : index
    %c0_2 = arith.constant 0 : index
    %2 = vector.load %arg2[%c0_1, %c0_2] : memref<16x256xbf16, #tpu.memory_space<vmem>>, vector<16x256xbf16>
    %cst = arith.constant dense<0.000000e+00> : vector<40x256xf32>
    %3 = tpu.matmul %1, %2, %cst {dimension_numbers = #tpu.dot_dimension_numbers<[1], [0], [0], [1], [0, 0, 1, 1], [], []>} : vector<40x16xbf16>, vector<16x256xbf16>, vector<40x256xf32> -> vector<40x256xf32>
    %4 = arith.truncf %3 : vector<40x256xf32> to vector<40x256xbf16>
    %c0_3 = arith.constant 0 : index
    %c0_4 = arith.constant 0 : index
    %5 = vector.load %arg3[%c0_3, %c0_4] : memref<1x256xbf16, #tpu.memory_space<vmem>>, vector<1x256xbf16>
    %6 = vector.broadcast %5 : vector<1x256xbf16> to vector<40x256xbf16>
    %7 = arith.addf %4, %6 : vector<40x256xbf16>
    %cst_5 = arith.constant 0.000000e+00 : bf16
    %8 = vector.broadcast %cst_5 : bf16 to vector<40x256xbf16>
    %9 = arith.maximumf %7, %8 : vector<40x256xbf16>
    %c0_6 = arith.constant 0 : index
    %c0_7 = arith.constant 0 : index
    %10 = vector.load %arg4[%c0_6, %c0_7] : memref<256x256xbf16, #tpu.memory_space<vmem>>, vector<256x256xbf16>
    %cst_8 = arith.constant dense<0.000000e+00> : vector<40x256xf32>
    %11 = tpu.matmul %9, %10, %cst_8 {dimension_numbers = #tpu.dot_dimension_numbers<[1], [0], [0], [1], [0, 0, 1, 1], [], []>} : vector<40x256xbf16>, vector<256x256xbf16>, vector<40x256xf32> -> vector<40x256xf32>
    %12 = arith.truncf %11 : vector<40x256xf32> to vector<40x256xbf16>
    %c0_9 = arith.constant 0 : index
    %c0_10 = arith.constant 0 : index
    %13 = vector.load %arg5[%c0_9, %c0_10] : memref<1x256xbf16, #tpu.memory_space<vmem>>, vector<1x256xbf16>
    %14 = vector.broadcast %13 : vector<1x256xbf16> to vector<40x256xbf16>
    %15 = arith.addf %12, %14 : vector<40x256xbf16>
    %cst_11 = arith.constant 0.000000e+00 : bf16
    %16 = vector.broadcast %cst_11 : bf16 to vector<40x256xbf16>
    %17 = arith.maximumf %15, %16 : vector<40x256xbf16>
    %c0_12 = arith.constant 0 : index
    %c0_13 = arith.constant 0 : index
    %18 = vector.load %arg6[%c0_12, %c0_13] : memref<256x128xbf16, #tpu.memory_space<vmem>>, vector<256x128xbf16>
    %cst_14 = arith.constant dense<0.000000e+00> : vector<40x128xf32>
    %19 = tpu.matmul %17, %18, %cst_14 {dimension_numbers = #tpu.dot_dimension_numbers<[1], [0], [0], [1], [0, 0, 1, 1], [], []>} : vector<40x256xbf16>, vector<256x128xbf16>, vector<40x128xf32> -> vector<40x128xf32>
    %c0_15 = arith.constant 0 : index
    %c0_16 = arith.constant 0 : index
    %20 = vector.load %arg7[%c0_15, %c0_16] : memref<1x128xf32, #tpu.memory_space<vmem>>, vector<1x128xf32>
    %21 = vector.broadcast %20 : vector<1x128xf32> to vector<40x128xf32>
    %22 = arith.addf %19, %21 : vector<40x128xf32>
    %23 = math.tanh %22 : vector<40x128xf32>
    %c0_17 = arith.constant 0 : index
    %c0_18 = arith.constant 0 : index
    %24 = vector.load %arg8[%c0_17, %c0_18] : memref<40x128xf32, #tpu.memory_space<vmem>>, vector<40x128xf32>
    tpu.vector_store %arg8[%c0_17, %c0_18], %23 {strides = array<i32>} : memref<40x128xf32, #tpu.memory_space<vmem>>, vector<40x128xf32>,
    return
  }
  func.func @transform_0(%arg0: i32) -> (i32, i32) {
    %c0_i32 = arith.constant 0 : i32
    %c0_i32_0 = arith.constant 0 : i32
    return %arg0, %c0_i32 : i32, i32
  }
  func.func @transform_1(%arg0: i32) -> (i32, i32) {
    %c0_i32 = arith.constant 0 : i32
    %c0_i32_0 = arith.constant 0 : i32
    %c0_i32_1 = arith.constant 0 : i32
    return %c0_i32, %c0_i32_0 : i32, i32
  }
  func.func @transform_2(%arg0: i32) -> (i32, i32) {
    %c0_i32 = arith.constant 0 : i32
    %c0_i32_0 = arith.constant 0 : i32
    %c0_i32_1 = arith.constant 0 : i32
    return %c0_i32, %c0_i32_0 : i32, i32
  }
  func.func @transform_3(%arg0: i32) -> (i32, i32) {
    %c0_i32 = arith.constant 0 : i32
    %c0_i32_0 = arith.constant 0 : i32
    %c0_i32_1 = arith.constant 0 : i32
    return %c0_i32, %c0_i32_0 : i32, i32
  }
  func.func @transform_4(%arg0: i32) -> (i32, i32) {
    %c0_i32 = arith.constant 0 : i32
    %c0_i32_0 = arith.constant 0 : i32
    %c0_i32_1 = arith.constant 0 : i32
    return %c0_i32, %c0_i32_0 : i32, i32
  }
  func.func @transform_5(%arg0: i32) -> (i32, i32) {
    %c0_i32 = arith.constant 0 : i32
    %c0_i32_0 = arith.constant 0 : i32
    %c0_i32_1 = arith.constant 0 : i32
    return %c0_i32, %c0_i32_0 : i32, i32
  }
  func.func @transform_6(%arg0: i32) -> (i32, i32) {
    %c0_i32 = arith.constant 0 : i32
    %c0_i32_0 = arith.constant 0 : i32
    %c0_i32_1 = arith.constant 0 : i32
    return %c0_i32, %c0_i32_0 : i32, i32
  }
  func.func @transform_7(%arg0: i32) -> (i32, i32) {
    %c0_i32 = arith.constant 0 : i32
    %c0_i32_0 = arith.constant 0 : i32
    return %arg0, %c0_i32 : i32, i32
  }
}

</mosaic_0001>

<llo_original>
// kernel: tpu_custom_call.1
$region0: #{tpu_custom_call.1}
  #allocation0 [shape = 'u32[]', space=smem, size = 0x4, offset = 0x4, fixed_abs, tag = 'smem constant byte address 0x4 - core index']
  #allocation1 [shape = 'u32[72,128]{1,0:T(1,128)}', space=vmem, size = 0x9000, scoped, tag = 'internal scratch']
  %s0 = inlined_call_operand.vmem [shape: f32[37,16], index: 0, kind: input, shape index: {}]
  %s1 = inlined_call_operand.vmem [shape: bf16[16,256], index: 1, kind: input, shape index: {}]
  %s2 = inlined_call_operand.vmem [shape: bf16[1,256], index: 2, kind: input, shape index: {}]
  %s3 = inlined_call_operand.hbm [shape: bf16[256,256], index: 3, kind: input, shape index: {}]
  %s4 = inlined_call_operand.vmem [shape: bf16[1,256], index: 4, kind: input, shape index: {}]
  %s5 = inlined_call_operand.hbm [shape: bf16[256,128], index: 5, kind: input, shape index: {}]
  %s6 = inlined_call_operand.vmem [shape: f32[1,128], index: 6, kind: input, shape index: {}]
  %s7 = inlined_call_operand.hbm [shape: f32[37,128], index: 7, kind: output, shape index: {}]
  %s8 = sld [smem:[#allocation0]]
  $region46: #{tpu_custom_call.1} parent=0
    _
  %s10 = ssub.s32 1, %s8
  %s11 = scalar_select 0, %s10, %s8
  $region1: #{tpu_custom_call.1} parent=0
    #allocation2 [shape = 'u8[131072]{0}', space=vmem, size = 0x20000, scoped, tag = 'input window, operand 3, single buffered']
    #allocation3 [shape = 's32[1]{0}', space=sflag, size = 0x4, scoped, tag = 'scoped memory for tpu_custom_call.1']
    #allocation4 [shape = 's32[1]{0}', space=sflag, size = 0x4, scoped, tag = 'scoped memory for tpu_custom_call.1']
    #allocation5 [shape = 'u8[65536]{0}', space=vmem, size = 0x10000, scoped, tag = 'input window, operand 5, single buffered']
    #allocation6 [shape = 's32[1]{0}', space=sflag, size = 0x4, scoped, tag = 'scoped memory for tpu_custom_call.1']
    #allocation7 [shape = 'u8[20480]{0}', space=vmem, size = 0x5000, scoped, tag = 'output window, operand 0, single buffered']
    %12 = vsyncpa [#allocation3], 0
    %13 = vsyncpa [#allocation6], 0
    %14 = vsyncpa [#allocation4], 0
    // Predicated region
    $region2: #{tpu_custom_call.1} parent=1 // pred_check
      _
    $region3: #{tpu_custom_call.1} parent=1 // pred_check_branch
      %16 = sbr.rel (0) target = $region5
    $region4: #{tpu_custom_call.1} parent=1 // pred_region
      _
    $region5: #{tpu_custom_call.1} parent=1 // pred_fallthru
      _
    // Predicated region
    $region6: #{tpu_custom_call.1} parent=1 // pred_check
      _
    $region7: #{tpu_custom_call.1} parent=1 // pred_check_branch
      %18 = sbr.rel (0) target = $region9
    $region8: #{tpu_custom_call.1} parent=1 // pred_region
      _
    $region9: #{tpu_custom_call.1} parent=1 // pred_fallthru
      _
    // Predicated region
    $region10: #{tpu_custom_call.1} parent=1 // pred_check
      _
    $region11: #{tpu_custom_call.1} parent=1 // pred_check_branch
      %20 = sbr.rel (0) target = $region13
    $region12: #{tpu_custom_call.1} parent=1 // pred_region
      _
    $region13: #{tpu_custom_call.1} parent=1 // pred_fallthru
      _
    // Predicated region
    $region14: #{tpu_custom_call.1} parent=1 // pred_check
      _
    $region15: #{tpu_custom_call.1} parent=1 // pred_check_branch
      %22 = sbr.rel (0) target = $region17
    $region16: #{tpu_custom_call.1} parent=1 // pred_region
      %24 = vsyncadd [#allocation3], 0
      %s25 = sshll.u32 %s3, 4
      %s26 = int_to_ptr.hbm [resolvable:$true] %s25
      %s27 = sshll.u32 [#allocation2], 4
      %s28 = int_to_ptr.vmem [resolvable:$true] %s27
      %33 = dma.hbm_to_vmem [thread:$0]  %s26, 4096, %s28, [#allocation3], 128, 128, 8
    $region17: #{tpu_custom_call.1} parent=1 // pred_fallthru
      _
    // Predicated region
    $region18: #{tpu_custom_call.1} parent=1 // pred_check
      _
    $region19: #{tpu_custom_call.1} parent=1 // pred_check_branch
      %35 = sbr.rel (0) target = $region21
    $region20: #{tpu_custom_call.1} parent=1 // pred_region
      _
    $region21: #{tpu_custom_call.1} parent=1 // pred_fallthru
      _
    // Predicated region
    $region22: #{tpu_custom_call.1} parent=1 // pred_check
      _
    $region23: #{tpu_custom_call.1} parent=1 // pred_check_branch
      %37 = sbr.rel (0) target = $region25
    $region24: #{tpu_custom_call.1} parent=1 // pred_region
      %39 = vsyncadd [#allocation6], 0
      %s40 = sshll.u32 %s5, 4
      %s41 = int_to_ptr.hbm [resolvable:$true] %s40
      %s42 = sshll.u32 [#allocation5], 4
      %s43 = int_to_ptr.vmem [resolvable:$true] %s42
      %48 = dma.hbm_to_vmem [thread:$0]  %s41, 2048, %s43, [#allocation6], 64, 64, 4
    $region25: #{tpu_custom_call.1} parent=1 // pred_fallthru
      _
    // Predicated region
    $region26: #{tpu_custom_call.1} parent=1 // pred_check
      _
    $region27: #{tpu_custom_call.1} parent=1 // pred_check_branch
      %50 = sbr.rel (0) target = $region29
    $region28: #{tpu_custom_call.1} parent=1 // pred_region
      _
    $region29: #{tpu_custom_call.1} parent=1 // pred_fallthru
      _
    // Predicated region
    $region30: #{tpu_custom_call.1} parent=1 // pred_check
      _
    $region31: #{tpu_custom_call.1} parent=1 // pred_check_branch
      %52 = sbr.rel (0) target = $region33
    $region32: #{tpu_custom_call.1} parent=1 // pred_region
      %54 = dma.done [#allocation3], 4096
    $region33: #{tpu_custom_call.1} parent=1 // pred_fallthru
      _
    // Predicated region
    $region34: #{tpu_custom_call.1} parent=1 // pred_check
      _
    $region35: #{tpu_custom_call.1} parent=1 // pred_check_branch
      %56 = sbr.rel (0) target = $region37
    $region36: #{tpu_custom_call.1} parent=1 // pred_region
      %58 = dma.done [#allocation6], 2048
    $region37: #{tpu_custom_call.1} parent=1 // pred_fallthru
      _
    %v60 = vld [vmem:[%s0] sm:$0xff]
    %v61 = vld [vmem:[%s0 + $0x8] sm:$0xff]
    %v62 = vld [vmem:[%s0 + $0x10] sm:$0xff]
    %v63 = vld [vmem:[%s0 + $0x18] sm:$0xff]
    %v64 = vld [vmem:[%s0 + $0x20] sm:$0xff]
    %v65 = vpack.c.bf16 %v61, %v60
    %v66 = vpack.c.bf16 %v63, %v62
    %v67 = vpack.c.bf16 %v64, %v64
    %v68 = vld [vmem:[%s1] sm:$0xff]
    %v69 = vld [vmem:[%s1 + $0x8] sm:$0xff]
    %v72 = vunpack.c.l.b16 %v68
    %v73 = vunpack.c.h.b16 %v68
    %v74 = vunpack.c.l.b16 %v69
    %v75 = vunpack.c.h.b16 %v69
    %v76 = vpack.c.b16 %v74, %v72
    %v77 = vpack.c.b16 %v75, %v73
    %vm80 = vcmask 130048
    %v82 = vsel %vm80, %v65, 0
    %v85 = vsel %vm80, %v66, 0
    %v88 = vsel %vm80, %v67, 0
    %90 = vmatpush.bf16.msra.mxu0 0
    %91 = vmatpush.bf16.msra.mxu0 0
    %92 = vmatpush.bf16.msra.mxu0 0
    %93 = vmatpush.bf16.msra.mxu0 0
    %94 = vmatpush.bf16.msra.mxu0 0
    %95 = vmatpush.bf16.msra.mxu0 0
    %96 = vmatpush.bf16.msra.mxu0 0
    %97 = vmatpush.bf16.msra.mxu0 %v76
    %98 = vmatmul.bf16.gmra.mxu0 %v82
    %v99 = vpop.f32.mrf.mxu0
    %v100 = vadd.f32 0.0, %v99
    %v101 = vpop.f32.mrf.mxu0
    %v102 = vadd.f32 0.0, %v101
    %103 = vmatmul.bf16.gmra.mxu0 %v85
    %v104 = vpop.f32.mrf.mxu0
    %v105 = vadd.f32 0.0, %v104
    %v106 = vpop.f32.mrf.mxu0
    %v107 = vadd.f32 0.0, %v106
    %108 = vmatmul.bf16.gmra.mxu0 %v88
    %v109 = vpop.f32.mrf.mxu0
    %v110 = vadd.f32 0.0, %v109
    %v111 = vpop.f32.mrf.mxu0
    %112 = vdwg.mxu0
    %113 = vmatpush.bf16.msra.mxu0 0
    %114 = vmatpush.bf16.msra.mxu0 0
    %115 = vmatpush.bf16.msra.mxu0 0
    %116 = vmatpush.bf16.msra.mxu0 0
    %117 = vmatpush.bf16.msra.mxu0 0
    %118 = vmatpush.bf16.msra.mxu0 0
    %119 = vmatpush.bf16.msra.mxu0 0
    %120 = vmatpush.bf16.msra.mxu0 %v77
    %121 = vmatmul.bf16.gmra.mxu0 %v82
    %v122 = vpop.f32.mrf.mxu0
    %v123 = vadd.f32 0.0, %v122
    %v124 = vpop.f32.mrf.mxu0
    %v125 = vadd.f32 0.0, %v124
    %126 = vmatmul.bf16.gmra.mxu0 %v85
    %v127 = vpop.f32.mrf.mxu0
    %v128 = vadd.f32 0.0, %v127
    %v129 = vpop.f32.mrf.mxu0
    %v130 = vadd.f32 0.0, %v129
    %131 = vmatmul.bf16.gmra.mxu0 %v88
    %v132 = vpop.f32.mrf.mxu0
    %v133 = vadd.f32 0.0, %v132
    %v134 = vpop.f32.mrf.mxu0
    %135 = vdwg.mxu0
    %v136 = vpack.c.bf16 %v123, %v100
    %v137 = vpack.c.bf16 %v125, %v102
    %v138 = vpack.c.bf16 %v128, %v105
    %v139 = vpack.c.bf16 %v130, %v107
    %v140 = vpack.c.bf16 %v133, %v110
    %v141 = vld [vmem:[%s2] sm:$0x3]
    %143 = vst [vmem:[#allocation1] ss:$9 sm:$0xff] %v141
    %v144 = vld [vmem:[#allocation1] sm:$0xff]
    %v145 = vld [vmem:[#allocation1 + $0x9] sm:$0xff]
    %v146 = vpack.i.b16 %v144, %v144
    %v148 = vperm.slane %v146, 0
    %v149 = vpack.i.b16 %v145, %v145
    %v151 = vperm.slane %v149, 0
    %v152 = vunpack.c.l.bf16 %v136
    %v153 = vunpack.c.h.bf16 %v136
    %v154 = vunpack.c.l.bf16 %v137
    %v155 = vunpack.c.h.bf16 %v137
    %v156 = vunpack.c.l.bf16 %v138
    %v157 = vunpack.c.h.bf16 %v138
    %v158 = vunpack.c.l.bf16 %v139
    %v159 = vunpack.c.h.bf16 %v139
    %v160 = vunpack.c.l.bf16 %v140
    %v161 = vunpack.c.h.bf16 %v140
    %v162 = vunpack.c.l.bf16 %v148
    %v163 = vunpack.c.l.bf16 %v151
    %v164 = vadd.f32 %v152, %v162
    %v165 = vadd.f32 %v153, %v163
    %v166 = vadd.f32 %v154, %v162
    %v167 = vadd.f32 %v155, %v163
    %v168 = vadd.f32 %v156, %v162
    %v169 = vadd.f32 %v157, %v163
    %v170 = vadd.f32 %v158, %v162
    %v171 = vadd.f32 %v159, %v163
    %v172 = vadd.f32 %v160, %v162
    %v173 = vadd.f32 %v161, %v163
    %v174 = vpack.c.bf16 %v165, %v164
    %v175 = vpack.c.bf16 %v167, %v166
    %v176 = vpack.c.bf16 %v169, %v168
    %v177 = vpack.c.bf16 %v171, %v170
    %v178 = vpack.c.bf16 %v173, %v172
    %v179 = vunpack.c.l.bf16 %v174
    %v180 = vunpack.c.h.bf16 %v174
    %v181 = vunpack.c.l.bf16 %v175
    %v182 = vunpack.c.h.bf16 %v175
    %v183 = vunpack.c.l.bf16 %v176
    %v184 = vunpack.c.h.bf16 %v176
    %v185 = vunpack.c.l.bf16 %v177
    %v186 = vunpack.c.h.bf16 %v177
    %v187 = vunpack.c.l.bf16 %v178
    %v188 = vunpack.c.h.bf16 %v178
    %v189 = vmax.f32 %v179, 0.0
    %v190 = vmax.f32 %v180, 0.0
    %v191 = vmax.f32 %v181, 0.0
    %v192 = vmax.f32 %v182, 0.0
    %v193 = vmax.f32 %v183, 0.0
    %v194 = vmax.f32 %v184, 0.0
    %v195 = vmax.f32 %v185, 0.0
    %v196 = vmax.f32 %v186, 0.0
    %v197 = vmax.f32 %v187, 0.0
    %v198 = vmax.f32 %v188, 0.0
    %v199 = vpack.c.bf16 %v191, %v189
    %v200 = vpack.c.bf16 %v192, %v190
    %v201 = vpack.c.bf16 %v195, %v193
    %v202 = vpack.c.bf16 %v196, %v194
    %v203 = vpack.c.bf16 %v197, %v197
    %v204 = vpack.c.bf16 %v198, %v198
    %v205 = vld [vmem:[#allocation2] sm:$0xff]
    %v206 = vld [vmem:[#allocation2 + $0x8] sm:$0xff]
    %v207 = vld [vmem:[#allocation2 + $0x10] sm:$0xff]
    %v208 = vld [vmem:[#allocation2 + $0x18] sm:$0xff]
    %v209 = vld [vmem:[#allocation2 + $0x20] sm:$0xff]
    %v210 = vld [vmem:[#allocation2 + $0x28] sm:$0xff]
    %v211 = vld [vmem:[#allocation2 + $0x30] sm:$0xff]
    %v212 = vld [vmem:[#allocation2 + $0x38] sm:$0xff]
    %v213 = vld [vmem:[#allocation2 + $0x40] sm:$0xff]
    %v214 = vld [vmem:[#allocation2 + $0x48] sm:$0xff]
    %v215 = vld [vmem:[#allocation2 + $0x50] sm:$0xff]
    %v216 = vld [vmem:[#allocation2 + $0x58] sm:$0xff]
    %v217 = vld [vmem:[#allocation2 + $0x60] sm:$0xff]
    %v218 = vld [vmem:[#allocation2 + $0x68] sm:$0xff]
    %v219 = vld [vmem:[#allocation2 + $0x70] sm:$0xff]
    %v220 = vld [vmem:[#allocation2 + $0x78] sm:$0xff]
    %v221 = vld [vmem:[#allocation2 + $0x80] sm:$0xff]
    %v222 = vld [vmem:[#allocation2 + $0x88] sm:$0xff]
    %v223 = vld [vmem:[#allocation2 + $0x90] sm:$0xff]
    %v224 = vld [vmem:[#allocation2 + $0x98] sm:$0xff]
    %v225 = vld [vmem:[#allocation2 + $0xa0] sm:$0xff]
    %v226 = vld [vmem:[#allocation2 + $0xa8] sm:$0xff]
    %v227 = vld [vmem:[#allocation2 + $0xb0] sm:$0xff]
    %v228 = vld [vmem:[#allocation2 + $0xb8] sm:$0xff]
    %v229 = vld [vmem:[#allocation2 + $0xc0] sm:$0xff]
    %v230 = vld [vmem:[#allocation2 + $0xc8] sm:$0xff]
    %v231 = vld [vmem:[#allocation2 + $0xd0] sm:$0xff]
    %v232 = vld [vmem:[#allocation2 + $0xd8] sm:$0xff]
    %v233 = vld [vmem:[#allocation2 + $0xe0] sm:$0xff]
    %v234 = vld [vmem:[#allocation2 + $0xe8] sm:$0xff]
    %v235 = vld [vmem:[#allocation2 + $0xf0] sm:$0xff]
    %v236 = vld [vmem:[#allocation2 + $0xf8] sm:$0xff]
    %v269 = vunpack.c.l.b16 %v205
    %v270 = vunpack.c.h.b16 %v205
    %v271 = vunpack.c.l.b16 %v206
    %v272 = vunpack.c.h.b16 %v206
    %v273 = vunpack.c.l.b16 %v207
    %v274 = vunpack.c.h.b16 %v207
    %v275 = vunpack.c.l.b16 %v208
    %v276 = vunpack.c.h.b16 %v208
    %v277 = vunpack.c.l.b16 %v209
    %v278 = vunpack.c.h.b16 %v209
    %v279 = vunpack.c.l.b16 %v210
    %v280 = vunpack.c.h.b16 %v210
    %v281 = vunpack.c.l.b16 %v211
    %v282 = vunpack.c.h.b16 %v211
    %v283 = vunpack.c.l.b16 %v212
    %v284 = vunpack.c.h.b16 %v212
    %v285 = vunpack.c.l.b16 %v213
    %v286 = vunpack.c.h.b16 %v213
    %v287 = vunpack.c.l.b16 %v214
    %v288 = vunpack.c.h.b16 %v214
    %v289 = vunpack.c.l.b16 %v215
    %v290 = vunpack.c.h.b16 %v215
    %v291 = vunpack.c.l.b16 %v216
    %v292 = vunpack.c.h.b16 %v216
    %v293 = vunpack.c.l.b16 %v217
    %v294 = vunpack.c.h.b16 %v217
    %v295 = vunpack.c.l.b16 %v218
    %v296 = vunpack.c.h.b16 %v218
    %v297 = vunpack.c.l.b16 %v219
    %v298 = vunpack.c.h.b16 %v219
    %v299 = vunpack.c.l.b16 %v220
    %v300 = vunpack.c.h.b16 %v220
    %v301 = vunpack.c.l.b16 %v221
    %v302 = vunpack.c.h.b16 %v221
    %v303 = vunpack.c.l.b16 %v222
    %v304 = vunpack.c.h.b16 %v222
    %v305 = vunpack.c.l.b16 %v223
    %v306 = vunpack.c.h.b16 %v223
    %v307 = vunpack.c.l.b16 %v224
    %v308 = vunpack.c.h.b16 %v224
    %v309 = vunpack.c.l.b16 %v225
    %v310 = vunpack.c.h.b16 %v225
    %v311 = vunpack.c.l.b16 %v226
    %v312 = vunpack.c.h.b16 %v226
    %v313 = vunpack.c.l.b16 %v227
    %v314 = vunpack.c.h.b16 %v227
    %v315 = vunpack.c.l.b16 %v228
    %v316 = vunpack.c.h.b16 %v228
    %v317 = vunpack.c.l.b16 %v229
    %v318 = vunpack.c.h.b16 %v229
    %v319 = vunpack.c.l.b16 %v230
    %v320 = vunpack.c.h.b16 %v230
    %v321 = vunpack.c.l.b16 %v231
    %v322 = vunpack.c.h.b16 %v231
    %v323 = vunpack.c.l.b16 %v232
    %v324 = vunpack.c.h.b16 %v232
    %v325 = vunpack.c.l.b16 %v233
    %v326 = vunpack.c.h.b16 %v233
    %v327 = vunpack.c.l.b16 %v234
    %v328 = vunpack.c.h.b16 %v234
    %v329 = vunpack.c.l.b16 %v235
    %v330 = vunpack.c.h.b16 %v235
    %v331 = vunpack.c.l.b16 %v236
    %v332 = vunpack.c.h.b16 %v236
    %v333 = vpack.c.b16 %v271, %v269
    %v334 = vpack.c.b16 %v272, %v270
    %v335 = vpack.c.b16 %v275, %v273
    %v336 = vpack.c.b16 %v276, %v274
    %v337 = vpack.c.b16 %v279, %v277
    %v338 = vpack.c.b16 %v280, %v278
    %v339 = vpack.c.b16 %v283, %v281
    %v340 = vpack.c.b16 %v284, %v282
    %v341 = vpack.c.b16 %v287, %v285
    %v342 = vpack.c.b16 %v288, %v286
    %v343 = vpack.c.b16 %v291, %v289
    %v344 = vpack.c.b16 %v292, %v290
    %v345 = vpack.c.b16 %v295, %v293
    %v346 = vpack.c.b16 %v296, %v294
    %v347 = vpack.c.b16 %v299, %v297
    %v348 = vpack.c.b16 %v300, %v298
    %v349 = vpack.c.b16 %v303, %v301
    %v350 = vpack.c.b16 %v304, %v302
    %v351 = vpack.c.b16 %v307, %v305
    %v352 = vpack.c.b16 %v308, %v306
    %v353 = vpack.c.b16 %v311, %v309
    %v354 = vpack.c.b16 %v312, %v310
    %v355 = vpack.c.b16 %v315, %v313
    %v356 = vpack.c.b16 %v316, %v314
    %v357 = vpack.c.b16 %v319, %v317
    %v358 = vpack.c.b16 %v320, %v318
    %v359 = vpack.c.b16 %v323, %v321
    %v360 = vpack.c.b16 %v324, %v322
    %v361 = vpack.c.b16 %v327, %v325
    %v362 = vpack.c.b16 %v328, %v326
    %v363 = vpack.c.b16 %v331, %v329
    %v364 = vpack.c.b16 %v332, %v330
    %397 = vmatpush.bf16.msra.mxu0 %v347
    %398 = vmatpush.bf16.msra.mxu0 %v345
    %399 = vmatpush.bf16.msra.mxu0 %v343
    %400 = vmatpush.bf16.msra.mxu0 %v341
    %401 = vmatpush.bf16.msra.mxu0 %v339
    %402 = vmatpush.bf16.msra.mxu0 %v337
    %403 = vmatpush.bf16.msra.mxu0 %v335
    %404 = vmatpush.bf16.msra.mxu0 %v333
    %405 = vmatmul.bf16.gmra.mxu0 %v199
    %v406 = vpop.f32.mrf.mxu0
    %v407 = vadd.f32 0.0, %v406
    %v408 = vpop.f32.mrf.mxu0
    %v409 = vadd.f32 0.0, %v408
    %410 = vmatmul.bf16.gmra.mxu0 %v201
    %v411 = vpop.f32.mrf.mxu0
    %v412 = vadd.f32 0.0, %v411
    %v413 = vpop.f32.mrf.mxu0
    %v414 = vadd.f32 0.0, %v413
    %415 = vmatmul.bf16.gmra.mxu0 %v203
    %v416 = vpop.f32.mrf.mxu0
    %v417 = vadd.f32 0.0, %v416
    %v418 = vpop.f32.mrf.mxu0
    %419 = vdwg.mxu0
    %420 = vmatpush.bf16.msra.mxu0 %v363
    %421 = vmatpush.bf16.msra.mxu0 %v361
    %422 = vmatpush.bf16.msra.mxu0 %v359
    %423 = vmatpush.bf16.msra.mxu0 %v357
    %424 = vmatpush.bf16.msra.mxu0 %v355
    %425 = vmatpush.bf16.msra.mxu0 %v353
    %426 = vmatpush.bf16.msra.mxu0 %v351
    %427 = vmatpush.bf16.msra.mxu0 %v349
    %428 = vmatmul.bf16.gmra.mxu0 %v200
    %v429 = vpop.f32.mrf.mxu0
    %v430 = vadd.f32 %v407, %v429
    %v431 = vpop.f32.mrf.mxu0
    %v432 = vadd.f32 %v409, %v431
    %433 = vmatmul.bf16.gmra.mxu0 %v202
    %v434 = vpop.f32.mrf.mxu0
    %v435 = vadd.f32 %v412, %v434
    %v436 = vpop.f32.mrf.mxu0
    %v437 = vadd.f32 %v414, %v436
    %438 = vmatmul.bf16.gmra.mxu0 %v204
    %v439 = vpop.f32.mrf.mxu0
    %v440 = vadd.f32 %v417, %v439
    %v441 = vpop.f32.mrf.mxu0
    %442 = vdwg.mxu0
    %443 = vmatpush.bf16.msra.mxu0 %v348
    %444 = vmatpush.bf16.msra.mxu0 %v346
    %445 = vmatpush.bf16.msra.mxu0 %v344
    %446 = vmatpush.bf16.msra.mxu0 %v342
    %447 = vmatpush.bf16.msra.mxu0 %v340
    %448 = vmatpush.bf16.msra.mxu0 %v338
    %449 = vmatpush.bf16.msra.mxu0 %v336
    %450 = vmatpush.bf16.msra.mxu0 %v334
    %451 = vmatmul.bf16.gmra.mxu0 %v199
    %v452 = vpop.f32.mrf.mxu0
    %v453 = vadd.f32 0.0, %v452
    %v454 = vpop.f32.mrf.mxu0
    %v455 = vadd.f32 0.0, %v454
    %456 = vmatmul.bf16.gmra.mxu0 %v201
    %v457 = vpop.f32.mrf.mxu0
    %v458 = vadd.f32 0.0, %v457
    %v459 = vpop.f32.mrf.mxu0
    %v460 = vadd.f32 0.0, %v459
    %461 = vmatmul.bf16.gmra.mxu0 %v203
    %v462 = vpop.f32.mrf.mxu0
    %v463 = vadd.f32 0.0, %v462
    %v464 = vpop.f32.mrf.mxu0
    %465 = vdwg.mxu0
    %466 = vmatpush.bf16.msra.mxu0 %v364
    %467 = vmatpush.bf16.msra.mxu0 %v362
    %468 = vmatpush.bf16.msra.mxu0 %v360
    %469 = vmatpush.bf16.msra.mxu0 %v358
    %470 = vmatpush.bf16.msra.mxu0 %v356
    %471 = vmatpush.bf16.msra.mxu0 %v354
    %472 = vmatpush.bf16.msra.mxu0 %v352
    %473 = vmatpush.bf16.msra.mxu0 %v350
    %474 = vmatmul.bf16.gmra.mxu0 %v200
    %v475 = vpop.f32.mrf.mxu0
    %v476 = vadd.f32 %v453, %v475
    %v477 = vpop.f32.mrf.mxu0
    %v478 = vadd.f32 %v455, %v477
    %479 = vmatmul.bf16.gmra.mxu0 %v202
    %v480 = vpop.f32.mrf.mxu0
    %v481 = vadd.f32 %v458, %v480
    %v482 = vpop.f32.mrf.mxu0
    %v483 = vadd.f32 %v460, %v482
    %484 = vmatmul.bf16.gmra.mxu0 %v204
    %v485 = vpop.f32.mrf.mxu0
    %v486 = vadd.f32 %v463, %v485
    %v487 = vpop.f32.mrf.mxu0
    %488 = vdwg.mxu0
    %v489 = vpack.c.bf16 %v476, %v430
    %v490 = vpack.c.bf16 %v478, %v432
    %v491 = vpack.c.bf16 %v481, %v435
    %v492 = vpack.c.bf16 %v483, %v437
    %v493 = vpack.c.bf16 %v486, %v440
    %v494 = vld [vmem:[%s4] sm:$0x3]
    %496 = vst [vmem:[#allocation1] ss:$9 sm:$0xff] %v494
    %v497 = vld [vmem:[#allocation1] sm:$0xff]
    %v498 = vld [vmem:[#allocation1 + $0x9] sm:$0xff]
    %v499 = vpack.i.b16 %v497, %v497
    %v501 = vperm.slane %v499, 0
    %v502 = vpack.i.b16 %v498, %v498
    %v504 = vperm.slane %v502, 0
    %v505 = vunpack.c.l.bf16 %v489
    %v506 = vunpack.c.h.bf16 %v489
    %v507 = vunpack.c.l.bf16 %v490
    %v508 = vunpack.c.h.bf16 %v490
    %v509 = vunpack.c.l.bf16 %v491
    %v510 = vunpack.c.h.bf16 %v491
    %v511 = vunpack.c.l.bf16 %v492
    %v512 = vunpack.c.h.bf16 %v492
    %v513 = vunpack.c.l.bf16 %v493
    %v514 = vunpack.c.h.bf16 %v493
    %v515 = vunpack.c.l.bf16 %v501
    %v516 = vunpack.c.l.bf16 %v504
    %v517 = vadd.f32 %v505, %v515
    %v518 = vadd.f32 %v506, %v516
    %v519 = vadd.f32 %v507, %v515
    %v520 = vadd.f32 %v508, %v516
    %v521 = vadd.f32 %v509, %v515
    %v522 = vadd.f32 %v510, %v516
    %v523 = vadd.f32 %v511, %v515
    %v524 = vadd.f32 %v512, %v516
    %v525 = vadd.f32 %v513, %v515
    %v526 = vadd.f32 %v514, %v516
    %v527 = vpack.c.bf16 %v518, %v517
    %v528 = vpack.c.bf16 %v520, %v519
    %v529 = vpack.c.bf16 %v522, %v521
    %v530 = vpack.c.bf16 %v524, %v523
    %v531 = vpack.c.bf16 %v526, %v525
    %v532 = vunpack.c.l.bf16 %v527
    %v533 = vunpack.c.h.bf16 %v527
    %v534 = vunpack.c.l.bf16 %v528
    %v535 = vunpack.c.h.bf16 %v528
    %v536 = vunpack.c.l.bf16 %v529
    %v537 = vunpack.c.h.bf16 %v529
    %v538 = vunpack.c.l.bf16 %v530
    %v539 = vunpack.c.h.bf16 %v530
    %v540 = vunpack.c.l.bf16 %v531
    %v541 = vunpack.c.h.bf16 %v531
    %v542 = vmax.f32 %v532, 0.0
    %v543 = vmax.f32 %v533, 0.0
    %v544 = vmax.f32 %v534, 0.0
    %v545 = vmax.f32 %v535, 0.0
    %v546 = vmax.f32 %v536, 0.0
    %v547 = vmax.f32 %v537, 0.0
    %v548 = vmax.f32 %v538, 0.0
    %v549 = vmax.f32 %v539, 0.0
    %v550 = vmax.f32 %v540, 0.0
    %v551 = vmax.f32 %v541, 0.0
    %v552 = vpack.c.bf16 %v544, %v542
    %v553 = vpack.c.bf16 %v545, %v543
    %v554 = vpack.c.bf16 %v548, %v546
    %v555 = vpack.c.bf16 %v549, %v547
    %v556 = vpack.c.bf16 %v550, %v550
    %v557 = vpack.c.bf16 %v551, %v551
    %v558 = vld [vmem:[#allocation5] sm:$0xf]
    %v559 = vld [vmem:[#allocation5 + $0x4] sm:$0xf]
    %v560 = vld [vmem:[#allocation5 + $0x8] sm:$0xf]
    %v561 = vld [vmem:[#allocation5 + $0xc] sm:$0xf]
    %v562 = vld [vmem:[#allocation5 + $0x10] sm:$0xf]
    %v563 = vld [vmem:[#allocation5 + $0x14] sm:$0xf]
    %v564 = vld [vmem:[#allocation5 + $0x18] sm:$0xf]
    %v565 = vld [vmem:[#allocation5 + $0x1c] sm:$0xf]
    %v566 = vld [vmem:[#allocation5 + $0x20] sm:$0xf]
    %v567 = vld [vmem:[#allocation5 + $0x24] sm:$0xf]
    %v568 = vld [vmem:[#allocation5 + $0x28] sm:$0xf]
    %v569 = vld [vmem:[#allocation5 + $0x2c] sm:$0xf]
    %v570 = vld [vmem:[#allocation5 + $0x30] sm:$0xf]
    %v571 = vld [vmem:[#allocation5 + $0x34] sm:$0xf]
    %v572 = vld [vmem:[#allocation5 + $0x38] sm:$0xf]
    %v573 = vld [vmem:[#allocation5 + $0x3c] sm:$0xf]
    %v574 = vld [vmem:[#allocation5 + $0x40] sm:$0xf]
    %v575 = vld [vmem:[#allocation5 + $0x44] sm:$0xf]
    %v576 = vld [vmem:[#allocation5 + $0x48] sm:$0xf]
    %v577 = vld [vmem:[#allocation5 + $0x4c] sm:$0xf]
    %v578 = vld [vmem:[#allocation5 + $0x50] sm:$0xf]
    %v579 = vld [vmem:[#allocation5 + $0x54] sm:$0xf]
    %v580 = vld [vmem:[#allocation5 + $0x58] sm:$0xf]
    %v581 = vld [vmem:[#allocation5 + $0x5c] sm:$0xf]
    %v582 = vld [vmem:[#allocation5 + $0x60] sm:$0xf]
    %v583 = vld [vmem:[#allocation5 + $0x64] sm:$0xf]
    %v584 = vld [vmem:[#allocation5 + $0x68] sm:$0xf]
    %v585 = vld [vmem:[#allocation5 + $0x6c] sm:$0xf]
    %v586 = vld [vmem:[#allocation5 + $0x70] sm:$0xf]
    %v587 = vld [vmem:[#allocation5 + $0x74] sm:$0xf]
    %v588 = vld [vmem:[#allocation5 + $0x78] sm:$0xf]
    %v589 = vld [vmem:[#allocation5 + $0x7c] sm:$0xf]
    %v590 = vld [vmem:[%s6] sm:$0x1]
    %v592 = vperm.slane %v590, 0
    %v626 = vunpack.c.l.b16 %v558
    %v627 = vunpack.c.l.b16 %v559
    %v628 = vunpack.c.l.b16 %v560
    %v629 = vunpack.c.l.b16 %v561
    %v630 = vunpack.c.l.b16 %v562
    %v631 = vunpack.c.l.b16 %v563
    %v632 = vunpack.c.l.b16 %v564
    %v633 = vunpack.c.l.b16 %v565
    %v634 = vunpack.c.l.b16 %v566
    %v635 = vunpack.c.l.b16 %v567
    %v636 = vunpack.c.l.b16 %v568
    %v637 = vunpack.c.l.b16 %v569
    %v638 = vunpack.c.l.b16 %v570
    %v639 = vunpack.c.l.b16 %v571
    %v640 = vunpack.c.l.b16 %v572
    %v641 = vunpack.c.l.b16 %v573
    %v642 = vunpack.c.l.b16 %v574
    %v643 = vunpack.c.l.b16 %v575
    %v644 = vunpack.c.l.b16 %v576
    %v645 = vunpack.c.l.b16 %v577
    %v646 = vunpack.c.l.b16 %v578
    %v647 = vunpack.c.l.b16 %v579
    %v648 = vunpack.c.l.b16 %v580
    %v649 = vunpack.c.l.b16 %v581
    %v650 = vunpack.c.l.b16 %v582
    %v651 = vunpack.c.l.b16 %v583
    %v652 = vunpack.c.l.b16 %v584
    %v653 = vunpack.c.l.b16 %v585
    %v654 = vunpack.c.l.b16 %v586
    %v655 = vunpack.c.l.b16 %v587
    %v656 = vunpack.c.l.b16 %v588
    %v657 = vunpack.c.l.b16 %v589
    %v658 = vpack.c.b16 %v627, %v626
    %v659 = vpack.c.b16 %v629, %v628
    %v660 = vpack.c.b16 %v631, %v630
    %v661 = vpack.c.b16 %v633, %v632
    %v662 = vpack.c.b16 %v635, %v634
    %v663 = vpack.c.b16 %v637, %v636
    %v664 = vpack.c.b16 %v639, %v638
    %v665 = vpack.c.b16 %v641, %v640
    %v666 = vpack.c.b16 %v643, %v642
    %v667 = vpack.c.b16 %v645, %v644
    %v668 = vpack.c.b16 %v647, %v646
    %v669 = vpack.c.b16 %v649, %v648
    %v670 = vpack.c.b16 %v651, %v650
    %v671 = vpack.c.b16 %v653, %v652
    %v672 = vpack.c.b16 %v655, %v654
    %v673 = vpack.c.b16 %v657, %v656
    %690 = vmatpush.bf16.msra.mxu0 %v665
    %691 = vmatpush.bf16.msra.mxu0 %v664
    %692 = vmatpush.bf16.msra.mxu0 %v663
    %693 = vmatpush.bf16.msra.mxu0 %v662
    %694 = vmatpush.bf16.msra.mxu0 %v661
    %695 = vmatpush.bf16.msra.mxu0 %v660
    %696 = vmatpush.bf16.msra.mxu0 %v659
    %697 = vmatpush.bf16.msra.mxu0 %v658
    %698 = vmatmul.bf16.gmra.mxu0 %v552
    %v699 = vpop.f32.mrf.mxu0
    %v700 = vadd.f32 %v592, %v699
    %v701 = vpop.f32.mrf.mxu0
    %v702 = vadd.f32 %v592, %v701
    %703 = vmatmul.bf16.gmra.mxu0 %v554
    %v704 = vpop.f32.mrf.mxu0
    %v705 = vadd.f32 %v592, %v704
    %v706 = vpop.f32.mrf.mxu0
    %v707 = vadd.f32 %v592, %v706
    %708 = vmatmul.bf16.gmra.mxu0 %v556
    %v709 = vpop.f32.mrf.mxu0
    %v710 = vadd.f32 %v592, %v709
    %v711 = vpop.f32.mrf.mxu0
    %712 = vdwg.mxu0
    %713 = vmatpush.bf16.msra.mxu0 %v673
    %714 = vmatpush.bf16.msra.mxu0 %v672
    %715 = vmatpush.bf16.msra.mxu0 %v671
    %716 = vmatpush.bf16.msra.mxu0 %v670
    %717 = vmatpush.bf16.msra.mxu0 %v669
    %718 = vmatpush.bf16.msra.mxu0 %v668
    %719 = vmatpush.bf16.msra.mxu0 %v667
    %720 = vmatpush.bf16.msra.mxu0 %v666
    %721 = vmatmul.bf16.gmra.mxu0 %v553
    %v722 = vpop.f32.mrf.mxu0
    %v723 = vadd.f32 %v700, %v722
    %v724 = vpop.f32.mrf.mxu0
    %v725 = vadd.f32 %v702, %v724
    %726 = vmatmul.bf16.gmra.mxu0 %v555
    %v727 = vpop.f32.mrf.mxu0
    %v728 = vadd.f32 %v705, %v727
    %v729 = vpop.f32.mrf.mxu0
    %v730 = vadd.f32 %v707, %v729
    %731 = vmatmul.bf16.gmra.mxu0 %v557
    %v732 = vpop.f32.mrf.mxu0
    %v733 = vadd.f32 %v710, %v732
    %v734 = vpop.f32.mrf.mxu0
    %735 = vdwg.mxu0
    %v736 = vtanh.pop %v723
    %v737 = vtanh.pop %v725
    %v738 = vtanh.pop %v728
    %v739 = vtanh.pop %v730
    %v740 = vtanh.pop %v733
    %741 = vst [vmem:[#allocation7] sm:$0xff] %v736
    %742 = vst [vmem:[#allocation7 + $0x8] sm:$0xff] %v737
    %743 = vst [vmem:[#allocation7 + $0x10] sm:$0xff] %v738
    %744 = vst [vmem:[#allocation7 + $0x18] sm:$0xff] %v739
    %745 = vst [vmem:[#allocation7 + $0x20] sm:$0xff] %v740
    // Predicated region
    $region38: #{tpu_custom_call.1} parent=1 // pred_check
      _
    $region39: #{tpu_custom_call.1} parent=1 // pred_check_branch
      %747 = sbr.rel (0) target = $region41
    $region40: #{tpu_custom_call.1} parent=1 // pred_region
      %749 = vsyncadd [#allocation4], 0
      %s750 = sshll.u32 [#allocation7], 4
      %s751 = int_to_ptr.vmem [resolvable:$true] %s750
      %s752 = sshll.u32 %s7, 4
      %s753 = int_to_ptr.hbm [resolvable:$true] %s752
      %758 = dma.vmem_to_hbm [thread:$0]  %s751, 640, %s753, [#allocation4], 128, 128, 8
    $region41: #{tpu_custom_call.1} parent=1 // pred_fallthru
      _
    // Predicated region
    $region42: #{tpu_custom_call.1} parent=1 // pred_check
      _
    $region43: #{tpu_custom_call.1} parent=1 // pred_check_branch
      %760 = sbr.rel (0) target = $region45
    $region44: #{tpu_custom_call.1} parent=1 // pred_region
      %762 = dma.done [#allocation4], 640
    $region45: #{tpu_custom_call.1} parent=1 // pred_fallthru
      _
    %763 = vsyncpa [#allocation3], 1
    %764 = vsyncpa [#allocation6], 1
    %765 = vsyncpa [#allocation4], 1

</llo_original>
